<compile_context>
chip_gen: v5e
topology: v5e:2x2
jax: 0.10.0
libtpu: 0.0.40
codegen_flags: <defaults>
</compile_context>

<pallas_src>
import math
import numpy as np
import jax
import jax.numpy as jnp
from jax import lax
from jax.experimental import pallas as pl
from jax.experimental.pallas import tpu as pltpu

# ----------------------------- module config --------------------------------
IN_CHANNELS = 1
KERNEL_SIZE = 2
STRIDE = 2
PADDING = 0
NUM_QREPS = 2
NUM_QUBITS = IN_CHANNELS * KERNEL_SIZE * KERNEL_SIZE   # must equal C*k*k (=4)
# TODO(synk): ansatz fixed to BEL (BasicEntanglerLayers w/ RZ); SEL/RL would
# only change the precomputed unitary U built in host glue, not the kernel.


# -------------- ansatz unitary / observable construction (glue) -------------
def _single_qubit_op(G, wire, n):
    # convention: qubit j == bit j of the basis-state index (qubit 0 = LSB)
    op = np.array([[1.0 + 0j]])
    for j in range(n - 1, -1, -1):
        op = np.kron(op, G if j == wire else np.eye(2, dtype=complex))
    return op


def _cnot(control, target, n):
    D = 1 << n
    M = np.zeros((D, D), dtype=complex)
    for b in range(D):
        b2 = b ^ (1 << target) if (b >> control) & 1 else b
        M[b2, b] = 1.0
    return M


def _rz(theta):
    return np.array([[np.exp(-0.5j * theta), 0.0],
                     [0.0, np.exp(0.5j * theta)]], dtype=complex)


def build_ansatz_unitary(weights, n):
    """BasicEntanglerLayers(rotation=RZ): per layer RZ on every wire, then a
    closed ring of CNOTs (single CNOT when n == 2)."""
    D = 1 << n
    U = np.eye(D, dtype=complex)
    for l in range(weights.shape[0]):
        for w in range(n):
            U = _single_qubit_op(_rz(weights[l, w]), w, n) @ U
        if n == 2:
            U = _cnot(0, 1, n) @ U
        elif n > 2:
            for w in range(n):
                U = _cnot(w, (w + 1) % n, n) @ U
    return U


def build_observables_folded(U, n):
    """Stacked real observables M[i*D + a, b] = Re(Ph^dag U^dag Y_i U Ph)[a, b]
    with Ph = diag((-i)^popcount(b)), so that for the real RX magnitude vector
    mag:  expval_i = mag^T Re(O'_i) mag  (imag part is antisymmetric -> drops)."""
    D = 1 << n
    Y = np.array([[0.0, -1j], [1j, 0.0]], dtype=complex)
    pop = np.array([bin(b).count("1") for b in range(D)])
    ph = np.array([1.0, -1j, -1.0, 1j], dtype=complex)[pop % 4]
    Ph = np.diag(ph)
    Ms = []
    for i in range(n):
        O = U.conj().T @ _single_qubit_op(Y, i, n) @ U
        Op = Ph.conj().T @ O @ Ph
        Ms.append(np.real(Op))
    return np.stack(Ms).reshape(n * D, D).astype(np.float32)   # (n*D, D)


# ------------------------------ Pallas kernel --------------------------------
def quanv_kernel(xT_ref, m_ref, o_ref):
    """xT_ref: (n, TP) patch features, lane axis = patch index.
       m_ref : (n*D, D) stacked real observables (phase pre-folded on host).
       o_ref : (n, TP) PauliY expectation values, lane-dense store."""
    x = xT_ref[...]                              # (n, TP) f32
    n, TP = x.shape
    D = 1 << n
    half = 0.5 * x
    c = jnp.cos(half)                            # (n, TP)
    s = jnp.sin(half)                            # (n, TP)
    # |amplitude(b)| of the RX product state (global phase folded into m_ref):
    #   mag[b, p] = prod_j (cos(x_j/2) if bit_j(b)==0 else sin(x_j/2))
    bidx = lax.broadcasted_iota(jnp.int32, (D, TP), 0)    # basis idx on sublanes
    mag = jnp.ones((D, TP), jnp.float32)
    for j in range(n):                            # static unroll, n is small
        bit = (bidx >> j) & 1
        mag = mag * jnp.where(bit == 0, c[j:j + 1, :], s[j:j + 1, :])
    # one fused MXU matmul for all n observables: (n*D, D) @ (D, TP) -> (n*D, TP)
    w = jnp.dot(m_ref[...], mag, preferred_element_type=jnp.float32)
    cols = []
    for i in range(n):                            # <mag|Re(O'_i)|mag>
        wi = w[i * D:(i + 1) * D, :]              # static sublane slice (D, TP)
        cols.append(jnp.sum(wi * mag, axis=0, keepdims=True))   # (1, TP)
    o_ref[...] = jnp.concatenate(cols, axis=0)    # (n, TP)


def _round_up(a, b):
    return ((a + b - 1) // b) * b


def quanv_pallas(flat_T, M, *, max_tile=2048):
    """flat_T: (n, P) feature-major patch matrix; M: (n*D, D) stacked observables.
    Returns (n, P) expectation values."""
    n, P = flat_T.shape
    nD, D = M.shape
    # Lane-dense tiling: tile a multiple of 128 lanes; target >=2 grid steps
    # (so the "parallel" axis can shard across v7x's two TensorCores) while
    # capping the tile so per-step VMEM stays small on every generation.
    tile_p = min(max_tile, _round_up(max(P // 2, 1), 128))
    Pp = _round_up(P, tile_p)
    if Pp != P:
        flat_T = jnp.pad(flat_T, ((0, 0), (0, Pp - P)))
    out = pl.pallas_call(
        quanv_kernel,
        out_shape=jax.ShapeDtypeStruct((n, Pp), jnp.float32),
        grid_spec=pltpu.PrefetchScalarGridSpec(
            num_scalar_prefetch=0,
            grid=(Pp // tile_p,),
            in_specs=[
                pl.BlockSpec((n, tile_p), lambda p: (0, p)),
                pl.BlockSpec((nD, D), lambda p: (0, 0)),    # constant block index
            ],
            out_specs=pl.BlockSpec((n, tile_p), lambda p: (0, p)),
        ),
        compiler_params=pltpu.CompilerParams(dimension_semantics=("parallel",)),
    )(flat_T, M)
    return out[:, :P]


# ------------------------------ forward glue ---------------------------------
def quanv_forward(x, M, *, k, s, p):
    B, C, H, W = x.shape
    n = C * k * k
    if p > 0:
        x = jnp.pad(x, ((0, 0), (0, 0), (p, p), (p, p)))
    Hp, Wp = x.shape[2], x.shape[3]
    Ho = (Hp - k) // s + 1
    Wo = (Wp - k) // s + 1
    if s == k:
        # non-overlapping windows: pure space-to-depth, no gather ops
        t = x[:, :, :Ho * k, :Wo * k].reshape(B, C, Ho, k, Wo, k)
    else:
        hi = (jnp.arange(Ho) * s)[:, None] + jnp.arange(k)[None, :]   # (Ho, k)
        wi = (jnp.arange(Wo) * s)[:, None] + jnp.arange(k)[None, :]   # (Wo, k)
        t = x[:, :, hi, :][:, :, :, :, wi]                            # (B,C,Ho,k,Wo,k)
    # Feature-major layout (n, P): features (c, kh, kw), patches (b, ho, wo).
    # TODO(synk): for C > 1 this uses channel-major per-patch features rather
    # than torch's raw .view(-1, C*k*k) memory grouping; identical for C == 1.
    flat_T = jnp.transpose(t, (1, 3, 5, 0, 2, 4)).reshape(n, B * Ho * Wo)
    flat_T = flat_T.astype(jnp.float32)
    qT = quanv_pallas(flat_T, M)                                  # (n, P)
    out = jnp.transpose(qT.reshape(n, B, Ho, Wo), (1, 0, 2, 3))   # (B, Q, Ho, Wo)
    return out, flat_T, (Ho, Wo)


# ----------------------- host reference (sanity check) -----------------------
def reference_numpy(flat, U, n):
    P = flat.shape[0]
    c = np.cos(flat / 2.0)
    s = np.sin(flat / 2.0)
    psi = np.ones((P, 1), dtype=complex)
    for j in range(n):
        qj = np.stack([c[:, j], -1j * s[:, j]], axis=-1)      # (P, 2)
        psi = (qj[:, :, None] * psi[:, None, :]).reshape(P, -1)
    evolved = psi @ U.T
    Y = np.array([[0.0, -1j], [1j, 0.0]], dtype=complex)
    outs = []
    for i in range(n):
        Yi = _single_qubit_op(Y, i, n)
        outs.append(np.real(np.sum(np.conj(evolved) * (evolved @ Yi.T), axis=-1)))
    return np.stack(outs, axis=-1)             # (P, n)


if __name__ == "__main__":
    key = jax.random.PRNGKey(0)
    kx, kw = jax.random.split(key)
    x = jax.random.normal(kx, (2, IN_CHANNELS, 16, 16), dtype=jnp.float32)
    weights = np.asarray(
        jax.random.uniform(kw, (NUM_QREPS, NUM_QUBITS),
                           minval=0.0, maxval=2.0 * math.pi),
        dtype=np.float64)

    U = build_ansatz_unitary(weights, NUM_QUBITS)
    M = jnp.asarray(build_observables_folded(U, NUM_QUBITS))

    out, flat_T, (Ho, Wo) = quanv_forward(x, M, k=KERNEL_SIZE, s=STRIDE, p=PADDING)
    out = jax.block_until_ready(out)
    assert out.shape == (x.shape[0], NUM_QUBITS, Ho, Wo)

    flat = np.asarray(flat_T, dtype=np.float64).T                 # (P, n)
    ref = reference_numpy(flat, U, NUM_QUBITS)
    ref = ref.reshape(x.shape[0], Ho, Wo, NUM_QUBITS).transpose(0, 3, 1, 2)
    np.testing.assert_allclose(np.asarray(out), ref, atol=2e-3, rtol=2e-3)

    print("KERNEL_OK")
</pallas_src>

<mosaic_0001>
module attributes {stable_mosaic.version = 11 : i64} {
  func.func @quanv_kernel(%arg0: i32, %arg1: memref<4x128xf32, #tpu.memory_space<vmem>>, %arg2: memref<64x16xf32, #tpu.memory_space<vmem>>, %arg3: memref<4x128xf32, #tpu.memory_space<vmem>>) attributes {dimension_semantics = [#tpu.dimension_semantics<parallel>], iteration_bounds = array<i64: 1>, scalar_prefetch = 0 : i64, scratch_operands = 0 : i64, tpu.core_type = #tpu.core_type<tc>, window_params = [{transform_indices = @transform_0, window_bounds = array<i64: 4, 128>}, {pipeline_mode = #tpu.pipeline_mode<synchronous>, transform_indices = @transform_1, window_bounds = array<i64: 64, 16>}, {transform_indices = @transform_2, window_bounds = array<i64: 4, 128>}]} {
    %c0 = arith.constant 0 : index
    %c0_0 = arith.constant 0 : index
    %0 = vector.load %arg1[%c0, %c0_0] : memref<4x128xf32, #tpu.memory_space<vmem>>, vector<4x128xf32>
    %cst = arith.constant 5.000000e-01 : f32
    %1 = vector.broadcast %cst : f32 to vector<4x128xf32>
    %2 = arith.mulf %1, %0 : vector<4x128xf32>
    %3 = math.cos %2 : vector<4x128xf32>
    %4 = math.sin %2 : vector<4x128xf32>
    %5 = tpu.iota {dimensions = array<i32: 0>} : vector<16x128xi32>
    %cst_1 = arith.constant 1.000000e+00 : f32
    %6 = vector.broadcast %cst_1 : f32 to vector<16x128xf32>
    %c0_i32 = arith.constant 0 : i32
    %7 = vector.broadcast %c0_i32 : i32 to vector<16x128xi32>
    %8 = arith.shrsi %5, %7 : vector<16x128xi32>
    %c1_i32 = arith.constant 1 : i32
    %9 = vector.broadcast %c1_i32 : i32 to vector<16x128xi32>
    %10 = arith.andi %8, %9 : vector<16x128xi32>
    %c0_i32_2 = arith.constant 0 : i32
    %11 = vector.broadcast %c0_i32_2 : i32 to vector<16x128xi32>
    %12 = arith.cmpi eq, %10, %11 : vector<16x128xi32>
    %13 = vector.extract_strided_slice %3 {offsets = [0, 0], sizes = [1, 128], strides = [1, 1]} : vector<4x128xf32> to vector<1x128xf32>
    %14 = vector.extract_strided_slice %4 {offsets = [0, 0], sizes = [1, 128], strides = [1, 1]} : vector<4x128xf32> to vector<1x128xf32>
    %15 = vector.shape_cast %13 : vector<1x128xf32> to vector<1x128xf32>
    %16 = vector.broadcast %15 : vector<1x128xf32> to vector<16x128xf32>
    %17 = vector.shape_cast %14 : vector<1x128xf32> to vector<1x128xf32>
    %18 = vector.broadcast %17 : vector<1x128xf32> to vector<16x128xf32>
    %19 = arith.select %12, %16, %18 : vector<16x128xi1>, vector<16x128xf32>
    %20 = arith.mulf %6, %19 : vector<16x128xf32>
    %c1_i32_3 = arith.constant 1 : i32
    %21 = vector.broadcast %c1_i32_3 : i32 to vector<16x128xi32>
    %22 = arith.shrsi %5, %21 : vector<16x128xi32>
    %c1_i32_4 = arith.constant 1 : i32
    %23 = vector.broadcast %c1_i32_4 : i32 to vector<16x128xi32>
    %24 = arith.andi %22, %23 : vector<16x128xi32>
    %c0_i32_5 = arith.constant 0 : i32
    %25 = vector.broadcast %c0_i32_5 : i32 to vector<16x128xi32>
    %26 = arith.cmpi eq, %24, %25 : vector<16x128xi32>
    %27 = vector.extract_strided_slice %3 {offsets = [1, 0], sizes = [1, 128], strides = [1, 1]} : vector<4x128xf32> to vector<1x128xf32>
    %28 = vector.extract_strided_slice %4 {offsets = [1, 0], sizes = [1, 128], strides = [1, 1]} : vector<4x128xf32> to vector<1x128xf32>
    %29 = vector.shape_cast %27 : vector<1x128xf32> to vector<1x128xf32>
    %30 = vector.broadcast %29 : vector<1x128xf32> to vector<16x128xf32>
    %31 = vector.shape_cast %28 : vector<1x128xf32> to vector<1x128xf32>
    %32 = vector.broadcast %31 : vector<1x128xf32> to vector<16x128xf32>
    %33 = arith.select %26, %30, %32 : vector<16x128xi1>, vector<16x128xf32>
    %34 = arith.mulf %20, %33 : vector<16x128xf32>
    %c2_i32 = arith.constant 2 : i32
    %35 = vector.broadcast %c2_i32 : i32 to vector<16x128xi32>
    %36 = arith.shrsi %5, %35 : vector<16x128xi32>
    %c1_i32_6 = arith.constant 1 : i32
    %37 = vector.broadcast %c1_i32_6 : i32 to vector<16x128xi32>
    %38 = arith.andi %36, %37 : vector<16x128xi32>
    %c0_i32_7 = arith.constant 0 : i32
    %39 = vector.broadcast %c0_i32_7 : i32 to vector<16x128xi32>
    %40 = arith.cmpi eq, %38, %39 : vector<16x128xi32>
    %41 = vector.extract_strided_slice %3 {offsets = [2, 0], sizes = [1, 128], strides = [1, 1]} : vector<4x128xf32> to vector<1x128xf32>
    %42 = vector.extract_strided_slice %4 {offsets = [2, 0], sizes = [1, 128], strides = [1, 1]} : vector<4x128xf32> to vector<1x128xf32>
    %43 = vector.shape_cast %41 : vector<1x128xf32> to vector<1x128xf32>
    %44 = vector.broadcast %43 : vector<1x128xf32> to vector<16x128xf32>
    %45 = vector.shape_cast %42 : vector<1x128xf32> to vector<1x128xf32>
    %46 = vector.broadcast %45 : vector<1x128xf32> to vector<16x128xf32>
    %47 = arith.select %40, %44, %46 : vector<16x128xi1>, vector<16x128xf32>
    %48 = arith.mulf %34, %47 : vector<16x128xf32>
    %c3_i32 = arith.constant 3 : i32
    %49 = vector.broadcast %c3_i32 : i32 to vector<16x128xi32>
    %50 = arith.shrsi %5, %49 : vector<16x128xi32>
    %c1_i32_8 = arith.constant 1 : i32
    %51 = vector.broadcast %c1_i32_8 : i32 to vector<16x128xi32>
    %52 = arith.andi %50, %51 : vector<16x128xi32>
    %c0_i32_9 = arith.constant 0 : i32
    %53 = vector.broadcast %c0_i32_9 : i32 to vector<16x128xi32>
    %54 = arith.cmpi eq, %52, %53 : vector<16x128xi32>
    %55 = vector.extract_strided_slice %3 {offsets = [3, 0], sizes = [1, 128], strides = [1, 1]} : vector<4x128xf32> to vector<1x128xf32>
    %56 = vector.extract_strided_slice %4 {offsets = [3, 0], sizes = [1, 128], strides = [1, 1]} : vector<4x128xf32> to vector<1x128xf32>
    %57 = vector.shape_cast %55 : vector<1x128xf32> to vector<1x128xf32>
    %58 = vector.broadcast %57 : vector<1x128xf32> to vector<16x128xf32>
    %59 = vector.shape_cast %56 : vector<1x128xf32> to vector<1x128xf32>
    %60 = vector.broadcast %59 : vector<1x128xf32> to vector<16x128xf32>
    %61 = arith.select %54, %58, %60 : vector<16x128xi1>, vector<16x128xf32>
    %62 = arith.mulf %48, %61 : vector<16x128xf32>
    %c0_10 = arith.constant 0 : index
    %c0_11 = arith.constant 0 : index
    %63 = vector.load %arg2[%c0_10, %c0_11] : memref<64x16xf32, #tpu.memory_space<vmem>>, vector<64x16xf32>
    %cst_12 = arith.constant dense<0.000000e+00> : vector<64x128xf32>
    %64 = tpu.matmul %63, %62, %cst_12 {dimension_numbers = #tpu.dot_dimension_numbers<[1], [0], [0], [1], [0, 0, 1, 1], [], []>} : vector<64x16xf32>, vector<16x128xf32>, vector<64x128xf32> -> vector<64x128xf32>
    %65 = vector.extract_strided_slice %64 {offsets = [0, 0], sizes = [16, 128], strides = [1, 1]} : vector<64x128xf32> to vector<16x128xf32>
    %66 = arith.mulf %65, %62 : vector<16x128xf32>
    %cst_13 = arith.constant dense<0.000000e+00> : vector<128xf32>
    %67 = vector.multi_reduction <add>, %66, %cst_13 [0] : vector<16x128xf32> to vector<128xf32>
    %68 = vector.shape_cast %67 : vector<128xf32> to vector<1x128xf32>
    %69 = vector.extract_strided_slice %64 {offsets = [16, 0], sizes = [16, 128], strides = [1, 1]} : vector<64x128xf32> to vector<16x128xf32>
    %70 = arith.mulf %69, %62 : vector<16x128xf32>
    %cst_14 = arith.constant dense<0.000000e+00> : vector<128xf32>
    %71 = vector.multi_reduction <add>, %70, %cst_14 [0] : vector<16x128xf32> to vector<128xf32>
    %72 = vector.shape_cast %71 : vector<128xf32> to vector<1x128xf32>
    %73 = vector.extract_strided_slice %64 {offsets = [32, 0], sizes = [16, 128], strides = [1, 1]} : vector<64x128xf32> to vector<16x128xf32>
    %74 = arith.mulf %73, %62 : vector<16x128xf32>
    %cst_15 = arith.constant dense<0.000000e+00> : vector<128xf32>
    %75 = vector.multi_reduction <add>, %74, %cst_15 [0] : vector<16x128xf32> to vector<128xf32>
    %76 = vector.shape_cast %75 : vector<128xf32> to vector<1x128xf32>
    %77 = vector.extract_strided_slice %64 {offsets = [48, 0], sizes = [16, 128], strides = [1, 1]} : vector<64x128xf32> to vector<16x128xf32>
    %78 = arith.mulf %77, %62 : vector<16x128xf32>
    %cst_16 = arith.constant dense<0.000000e+00> : vector<128xf32>
    %79 = vector.multi_reduction <add>, %78, %cst_16 [0] : vector<16x128xf32> to vector<128xf32>
    %80 = vector.shape_cast %79 : vector<128xf32> to vector<1x128xf32>
    %81 = tpu.concatenate %68, %72, %76, %80 in 0 : vector<1x128xf32>, vector<1x128xf32>, vector<1x128xf32>, vector<1x128xf32> -> vector<4x128xf32>
    %c0_17 = arith.constant 0 : index
    %c0_18 = arith.constant 0 : index
    %82 = vector.load %arg3[%c0_17, %c0_18] : memref<4x128xf32, #tpu.memory_space<vmem>>, vector<4x128xf32>
    tpu.vector_store %arg3[%c0_17, %c0_18], %81 {strides = array<i32>} : memref<4x128xf32, #tpu.memory_space<vmem>>, vector<4x128xf32>,
    return
  }
  func.func @transform_0(%arg0: i32) -> (i32, i32) {
    %c0_i32 = arith.constant 0 : i32
    %c0_i32_0 = arith.constant 0 : i32
    return %c0_i32, %arg0 : i32, i32
  }
  func.func @transform_1(%arg0: i32) -> (i32, i32) {
    %c0_i32 = arith.constant 0 : i32
    %c0_i32_0 = arith.constant 0 : i32
    %c0_i32_1 = arith.constant 0 : i32
    return %c0_i32, %c0_i32_0 : i32, i32
  }
  func.func @transform_2(%arg0: i32) -> (i32, i32) {
    %c0_i32 = arith.constant 0 : i32
    %c0_i32_0 = arith.constant 0 : i32
    return %c0_i32, %arg0 : i32, i32
  }
}

</mosaic_0001>

<llo_original>
// kernel: tpu_custom_call.1
$region0: #{tpu_custom_call.1}
  #allocation0 [shape = 'u32[]', space=smem, size = 0x4, offset = 0x4, fixed_abs, tag = 'smem constant byte address 0x4 - core index']
  #allocation1 [shape = 'u32[72,128]{1,0:T(1,128)}', space=vmem, size = 0x9000, scoped, tag = 'internal scratch']
  %s0 = inlined_call_operand.vmem [shape: f32[4,128], index: 0, kind: input, shape index: {}]
  %s1 = inlined_call_operand.vmem [shape: f32[64,16], index: 1, kind: input, shape index: {}]
  %s2 = inlined_call_operand.hbm [shape: f32[4,128], index: 2, kind: output, shape index: {}]
  %s3 = sld [smem:[#allocation0]]
  $region18: #{tpu_custom_call.1} parent=0
    _
  %s5 = ssub.s32 1, %s3
  %s6 = scalar_select 0, %s5, %s3
  $region1: #{tpu_custom_call.1} parent=0
    #allocation2 [shape = 'u8[2048]{0}', space=vmem, size = 0x800, scoped, tag = 'output window, operand 0, single buffered']
    #allocation3 [shape = 's32[1]{0}', space=sflag, size = 0x4, scoped, tag = 'scoped memory for tpu_custom_call.1']
    %7 = vsyncpa [#allocation3], 0
    // Predicated region
    $region2: #{tpu_custom_call.1} parent=1 // pred_check
      _
    $region3: #{tpu_custom_call.1} parent=1 // pred_check_branch
      %9 = sbr.rel (0) target = $region5
    $region4: #{tpu_custom_call.1} parent=1 // pred_region
      _
    $region5: #{tpu_custom_call.1} parent=1 // pred_fallthru
      _
    // Predicated region
    $region6: #{tpu_custom_call.1} parent=1 // pred_check
      _
    $region7: #{tpu_custom_call.1} parent=1 // pred_check_branch
      %11 = sbr.rel (0) target = $region9
    $region8: #{tpu_custom_call.1} parent=1 // pred_region
      _
    $region9: #{tpu_custom_call.1} parent=1 // pred_fallthru
      _
    %v12 = vld [vmem:[%s0] sm:$0xf]
    %v13 = vmul.f32 %v12, 0.5
    %v14 = vand.u32 2147483647, %v13
    %vm15 = vcmp.le.f32.partialorder %v14, 0.7853982
    %vm16 = vcmp.lt.s32.totalorder %v13, 0
    %v17 = vand.u32 %v13, 2139095040
    %v18 = vshrl.u32 %v17, 23
    %v19 = vsub.s32 %v18, 127
    %v20 = vand.u32 2147483647, %v13
    %v21 = vand.u32 %v20, 8388607
    %v22 = vor.u32 %v21, 8388608
    %v23 = vsub.s32 0, %v22
    %v24 = vadd.s32 %v19, 1
    %vm25 = vcmp.gt.s32.totalorder %v24, 0
    %v26 = vsel %vm25, %v24, 0
    %v27 = vshrl.u32 %v26, 5
    %v28 = vand.u32 %v26, 31
    %v29 = vsub.s32 32, %v28
    %v30 = vshrl.u32 683565275, %v29
    %v31 = vshll.u32 683565275, %v28
    %v32 = vshrl.u32 2475754826, %v29
    %v33 = vor.u32 %v31, %v32
    %v34 = vshll.u32 2475754826, %v28
    %v35 = vshrl.u32 2131351028, %v29
    %v36 = vor.u32 %v34, %v35
    %v37 = vshll.u32 2131351028, %v28
    %v38 = vshrl.u32 2102212464, %v29
    %v39 = vor.u32 %v37, %v38
    %v40 = vshll.u32 2102212464, %v28
    %v41 = vshrl.u32 920167782, %v29
    %v42 = vor.u32 %v40, %v41
    %v43 = vshll.u32 920167782, %v28
    %v44 = vshrl.u32 1326507024, %v29
    %v45 = vor.u32 %v43, %v44
    %vm46 = vcmp.lt.s32.totalorder %v27, 1
    %vm47 = vcmp.lt.s32.totalorder %v27, 2
    %vm48 = vcmp.lt.s32.totalorder %v27, 3
    %vm49 = vcmp.lt.s32.totalorder %v27, 4
    %v50 = vsel %vm46, %v30, %v33
    %v51 = vsel %vm49, %v39, 2102212464
    %v52 = vsel %vm48, %v36, %v51
    %v53 = vsel %vm47, %v50, %v52
    %v54 = vsel %vm46, %v33, %v36
    %v55 = vsel %vm49, %v42, 920167782
    %v56 = vsel %vm48, %v39, %v55
    %v57 = vsel %vm47, %v54, %v56
    %v58 = vsel %vm46, %v36, %v39
    %v59 = vsel %vm49, %v45, 1326507024
    %v60 = vsel %vm48, %v42, %v59
    %v61 = vsel %vm47, %v58, %v60
    %v62 = vshll.u32 %v22, 8
    %v63 = vand.u32 %v62, 65535
    %v64 = vshrl.u32 %v62, 16
    %v65 = vand.u32 %v61, 65535
    %v66 = vshrl.u32 %v61, 16
    %v67 = vmul.u32 %v63, %v65
    %v68 = vmul.u32 %v63, %v66
    %v69 = vmul.u32 %v64, %v65
    %v70 = vmul.u32 %v64, %v66
    %v71 = vshll.u32 %v68, 16
    %v72 = vshrl.u32 %v68, 16
    %v73 = vshll.u32 %v69, 16
    %v74 = vshrl.u32 %v69, 16
    %vm75 = vc.u32 %v67, %v71
    %v76 = vsel %vm75, 1, 0
    %v77 = vadd.s32 %v67, %v71
    %v78 = vadd.s32 %v70, %v76
    %vm79 = vc.u32 %v77, %v73
    %v80 = vsel %vm79, 1, 0
    %v81 = vadd.s32 %v77, %v73
    %v82 = vadd.s32 %v78, %v80
    %v83 = vadd.s32 %v82, %v72
    %v84 = vadd.s32 %v83, %v74
    %v85 = vand.u32 %v62, 65535
    %v86 = vshrl.u32 %v62, 16
    %v87 = vand.u32 %v57, 65535
    %v88 = vshrl.u32 %v57, 16
    %v89 = vmul.u32 %v85, %v87
    %v90 = vmul.u32 %v85, %v88
    %v91 = vmul.u32 %v86, %v87
    %v92 = vmul.u32 %v86, %v88
    %v93 = vshll.u32 %v90, 16
    %v94 = vshrl.u32 %v90, 16
    %v95 = vshll.u32 %v91, 16
    %v96 = vshrl.u32 %v91, 16
    %vm97 = vc.u32 %v89, %v93
    %v98 = vsel %vm97, 1, 0
    %v99 = vadd.s32 %v89, %v93
    %v100 = vadd.s32 %v92, %v98
    %vm101 = vc.u32 %v99, %v95
    %v102 = vsel %vm101, 1, 0
    %v103 = vadd.s32 %v99, %v95
    %v104 = vadd.s32 %v100, %v102
    %v105 = vadd.s32 %v104, %v94
    %v106 = vadd.s32 %v105, %v96
    %v107 = vmul.u32 %v62, %v53
    %v108 = vadd.s32 %v84, %v103
    %vm109 = vc.u32 %v84, %v103
    %v110 = vadd.s32 %v106, 1
    %v111 = vsel %vm109, %v110, %v106
    %v112 = vadd.s32 %v107, %v111
    %v113 = vadd.s32 %v112, 536870912
    %v114 = vshrl.u32 %v113, 30
    %v115 = vshll.u32 %v114, 30
    %v116 = vsub.s32 %v112, %v115
    %vm117 = vcmp.lt.s32.totalorder %v116, 0
    %v118 = vsub.s32 0, %v116
    %v119 = vsel %vm117, %v118, %v116
    %v120 = vclz %v119
    %v121 = vsub.s32 %v120, 2
    %vm122 = vcmp.gt.s32.totalorder 0, %v121
    %v123 = vsel %vm122, 0, %v121
    %v124 = vsub.s32 32, %v123
    %v125 = vshll.u32 %v116, %v123
    %v126 = vshrl.u32 %v108, %v124
    %v127 = vor.u32 %v125, %v126
    %v128 = vsub.s32 4294967266, %v123
    %v129 = vadd.s32 %v128, 127
    %v130 = vshll.u32 %v129, 23
    %v131 = vor.u32 4788187, %v130
    %v132 = vand.u32 2147483647, %v131
    %v134 = vcvt.s32.f32 %v127
    %v135 = vmul.f32 %v134, %v132
    %v136 = vxor.u32 %v135, 2147483648
    %v137 = vsel %vm16, %v136, %v135
    %v138 = vsub.s32 4, %v114
    %v139 = vsel %vm16, %v138, %v114
    %v140 = vsel %vm15, %v13, %v137
    %v141 = vsel %vm15, 0, %v139
    %v142 = vmul.f32 %v140, %v140
    %v143 = vmul.f32 %v142, -0.001358992
    %v144 = vadd.f32 %v143, 0.041655596
    %v145 = vmul.f32 %v142, %v144
    %v146 = vadd.f32 %v145, -0.4999988
    %v147 = vmul.f32 %v142, %v146
    %v148 = vadd.f32 1.0, %v147
    %v149 = vmul.f32 %v140, %v140
    %v150 = vmul.f32 %v149, -0.00019511016
    %v151 = vadd.f32 %v150, 0.008332121
    %v152 = vmul.f32 %v149, %v151
    %v153 = vadd.f32 %v152, -0.16666654
    %v154 = vmul.f32 %v149, %v153
    %v155 = vadd.f32 %v154, 1.0
    %v156 = vmul.f32 %v155, %v140
    %vm157 = vweird.f32 %v13
    %v158 = vand.u32 %v141, 3
    %vm159 = vcmp.lt.s32.totalorder %v158, 2
    %vm160 = vcmp.eq.s32.totalorder %v158, 0
    %v161 = vxor.u32 %v156, 2147483648
    %v162 = vsel %vm160, %v148, %v161
    %vm163 = vcmp.eq.s32.totalorder %v158, 2
    %v164 = vxor.u32 %v148, 2147483648
    %v165 = vsel %vm163, %v164, %v156
    %v166 = vsel %vm159, %v162, %v165
    %v167 = vsel %vm157, nan, %v166
    %v168 = vand.u32 2147483647, %v13
    %vm169 = vcmp.le.f32.partialorder %v168, 0.7853982
    %vm170 = vcmp.lt.s32.totalorder %v13, 0
    %v171 = vand.u32 %v13, 2139095040
    %v172 = vshrl.u32 %v171, 23
    %v173 = vsub.s32 %v172, 127
    %v174 = vand.u32 2147483647, %v13
    %v175 = vand.u32 %v174, 8388607
    %v176 = vor.u32 %v175, 8388608
    %v177 = vsub.s32 0, %v176
    %v178 = vadd.s32 %v173, 1
    %vm179 = vcmp.gt.s32.totalorder %v178, 0
    %v180 = vsel %vm179, %v178, 0
    %v181 = vshrl.u32 %v180, 5
    %v182 = vand.u32 %v180, 31
    %v183 = vsub.s32 32, %v182
    %v184 = vshrl.u32 683565275, %v183
    %v185 = vshll.u32 683565275, %v182
    %v186 = vshrl.u32 2475754826, %v183
    %v187 = vor.u32 %v185, %v186
    %v188 = vshll.u32 2475754826, %v182
    %v189 = vshrl.u32 2131351028, %v183
    %v190 = vor.u32 %v188, %v189
    %v191 = vshll.u32 2131351028, %v182
    %v192 = vshrl.u32 2102212464, %v183
    %v193 = vor.u32 %v191, %v192
    %v194 = vshll.u32 2102212464, %v182
    %v195 = vshrl.u32 920167782, %v183
    %v196 = vor.u32 %v194, %v195
    %v197 = vshll.u32 920167782, %v182
    %v198 = vshrl.u32 1326507024, %v183
    %v199 = vor.u32 %v197, %v198
    %vm200 = vcmp.lt.s32.totalorder %v181, 1
    %vm201 = vcmp.lt.s32.totalorder %v181, 2
    %vm202 = vcmp.lt.s32.totalorder %v181, 3
    %vm203 = vcmp.lt.s32.totalorder %v181, 4
    %v204 = vsel %vm200, %v184, %v187
    %v205 = vsel %vm203, %v193, 2102212464
    %v206 = vsel %vm202, %v190, %v205
    %v207 = vsel %vm201, %v204, %v206
    %v208 = vsel %vm200, %v187, %v190
    %v209 = vsel %vm203, %v196, 920167782
    %v210 = vsel %vm202, %v193, %v209
    %v211 = vsel %vm201, %v208, %v210
    %v212 = vsel %vm200, %v190, %v193
    %v213 = vsel %vm203, %v199, 1326507024
    %v214 = vsel %vm202, %v196, %v213
    %v215 = vsel %vm201, %v212, %v214
    %v216 = vshll.u32 %v176, 8
    %v217 = vand.u32 %v216, 65535
    %v218 = vshrl.u32 %v216, 16
    %v219 = vand.u32 %v215, 65535
    %v220 = vshrl.u32 %v215, 16
    %v221 = vmul.u32 %v217, %v219
    %v222 = vmul.u32 %v217, %v220
    %v223 = vmul.u32 %v218, %v219
    %v224 = vmul.u32 %v218, %v220
    %v225 = vshll.u32 %v222, 16
    %v226 = vshrl.u32 %v222, 16
    %v227 = vshll.u32 %v223, 16
    %v228 = vshrl.u32 %v223, 16
    %vm229 = vc.u32 %v221, %v225
    %v230 = vsel %vm229, 1, 0
    %v231 = vadd.s32 %v221, %v225
    %v232 = vadd.s32 %v224, %v230
    %vm233 = vc.u32 %v231, %v227
    %v234 = vsel %vm233, 1, 0
    %v235 = vadd.s32 %v231, %v227
    %v236 = vadd.s32 %v232, %v234
    %v237 = vadd.s32 %v236, %v226
    %v238 = vadd.s32 %v237, %v228
    %v239 = vand.u32 %v216, 65535
    %v240 = vshrl.u32 %v216, 16
    %v241 = vand.u32 %v211, 65535
    %v242 = vshrl.u32 %v211, 16
    %v243 = vmul.u32 %v239, %v241
    %v244 = vmul.u32 %v239, %v242
    %v245 = vmul.u32 %v240, %v241
    %v246 = vmul.u32 %v240, %v242
    %v247 = vshll.u32 %v244, 16
    %v248 = vshrl.u32 %v244, 16
    %v249 = vshll.u32 %v245, 16
    %v250 = vshrl.u32 %v245, 16
    %vm251 = vc.u32 %v243, %v247
    %v252 = vsel %vm251, 1, 0
    %v253 = vadd.s32 %v243, %v247
    %v254 = vadd.s32 %v246, %v252
    %vm255 = vc.u32 %v253, %v249
    %v256 = vsel %vm255, 1, 0
    %v257 = vadd.s32 %v253, %v249
    %v258 = vadd.s32 %v254, %v256
    %v259 = vadd.s32 %v258, %v248
    %v260 = vadd.s32 %v259, %v250
    %v261 = vmul.u32 %v216, %v207
    %v262 = vadd.s32 %v238, %v257
    %vm263 = vc.u32 %v238, %v257
    %v264 = vadd.s32 %v260, 1
    %v265 = vsel %vm263, %v264, %v260
    %v266 = vadd.s32 %v261, %v265
    %v267 = vadd.s32 %v266, 536870912
    %v268 = vshrl.u32 %v267, 30
    %v269 = vshll.u32 %v268, 30
    %v270 = vsub.s32 %v266, %v269
    %vm271 = vcmp.lt.s32.totalorder %v270, 0
    %v272 = vsub.s32 0, %v270
    %v273 = vsel %vm271, %v272, %v270
    %v274 = vclz %v273
    %v275 = vsub.s32 %v274, 2
    %vm276 = vcmp.gt.s32.totalorder 0, %v275
    %v277 = vsel %vm276, 0, %v275
    %v278 = vsub.s32 32, %v277
    %v279 = vshll.u32 %v270, %v277
    %v280 = vshrl.u32 %v262, %v278
    %v281 = vor.u32 %v279, %v280
    %v282 = vsub.s32 4294967266, %v277
    %v283 = vadd.s32 %v282, 127
    %v284 = vshll.u32 %v283, 23
    %v285 = vor.u32 4788187, %v284
    %v286 = vand.u32 2147483647, %v285
    %v288 = vcvt.s32.f32 %v281
    %v289 = vmul.f32 %v288, %v286
    %v290 = vxor.u32 %v289, 2147483648
    %v291 = vsel %vm170, %v290, %v289
    %v292 = vsub.s32 4, %v268
    %v293 = vsel %vm170, %v292, %v268
    %v294 = vsel %vm169, %v13, %v291
    %v295 = vsel %vm169, 0, %v293
    %v296 = vmul.f32 %v294, %v294
    %v297 = vmul.f32 %v296, -0.001358992
    %v298 = vadd.f32 %v297, 0.041655596
    %v299 = vmul.f32 %v296, %v298
    %v300 = vadd.f32 %v299, -0.4999988
    %v301 = vmul.f32 %v296, %v300
    %v302 = vadd.f32 1.0, %v301
    %v303 = vmul.f32 %v294, %v294
    %v304 = vmul.f32 %v303, -0.00019511016
    %v305 = vadd.f32 %v304, 0.008332121
    %v306 = vmul.f32 %v303, %v305
    %v307 = vadd.f32 %v306, -0.16666654
    %v308 = vmul.f32 %v303, %v307
    %v309 = vadd.f32 %v308, 1.0
    %v310 = vmul.f32 %v309, %v294
    %vm311 = vweird.f32 %v13
    %v312 = vadd.s32 %v295, 3
    %v313 = vand.u32 %v312, 3
    %vm314 = vcmp.lt.s32.totalorder %v313, 2
    %vm315 = vcmp.eq.s32.totalorder %v313, 0
    %v316 = vxor.u32 %v310, 2147483648
    %v317 = vsel %vm315, %v302, %v316
    %vm318 = vcmp.eq.s32.totalorder %v313, 2
    %v319 = vxor.u32 %v302, 2147483648
    %v320 = vsel %vm318, %v319, %v310
    %v321 = vsel %vm314, %v317, %v320
    %v322 = vsel %vm311, nan, %v321
    %v323 = vlaneseq
    %v324 = vshrl.u32 %v323, 7
    %v325 = vadd.s32 %v324, 8
    %v326 = vand.u32 %v324, 1
    %v327 = vand.u32 %v325, 1
    %vm328 = vcmp.eq.s32.totalorder %v326, 0
    %vm329 = vcmp.eq.s32.totalorder %v327, 0
    %v330 = vperm.slane %v167, 0
    %v331 = vperm.slane %v322, 0
    %v332 = vsel %vm328, %v330, %v331
    %v333 = vsel %vm329, %v330, %v331
    %v334 = vshra.s32 %v324, 1
    %v335 = vshra.s32 %v325, 1
    %v336 = vand.u32 %v334, 1
    %v337 = vand.u32 %v335, 1
    %vm338 = vcmp.eq.s32.totalorder %v336, 0
    %vm339 = vcmp.eq.s32.totalorder %v337, 0
    %v340 = vperm.slane %v167, 1
    %v341 = vperm.slane %v322, 1
    %v342 = vsel %vm338, %v340, %v341
    %v343 = vsel %vm339, %v340, %v341
    %v344 = vmul.f32 %v332, %v342
    %v345 = vmul.f32 %v333, %v343
    %v346 = vshra.s32 %v324, 2
    %v347 = vshra.s32 %v325, 2
    %v348 = vand.u32 %v346, 1
    %v349 = vand.u32 %v347, 1
    %vm350 = vcmp.eq.s32.totalorder %v348, 0
    %vm351 = vcmp.eq.s32.totalorder %v349, 0
    %v352 = vperm.slane %v167, 2
    %v353 = vperm.slane %v322, 2
    %v354 = vsel %vm350, %v352, %v353
    %v355 = vsel %vm351, %v352, %v353
    %v356 = vmul.f32 %v344, %v354
    %v357 = vmul.f32 %v345, %v355
    %v358 = vshra.s32 %v324, 3
    %v359 = vshra.s32 %v325, 3
    %v360 = vand.u32 %v358, 1
    %v361 = vand.u32 %v359, 1
    %vm362 = vcmp.eq.s32.totalorder %v360, 0
    %vm363 = vcmp.eq.s32.totalorder %v361, 0
    %v364 = vperm.slane %v167, 3
    %v365 = vperm.slane %v322, 3
    %v366 = vsel %vm362, %v364, %v365
    %v367 = vsel %vm363, %v364, %v365
    %v368 = vmul.f32 %v356, %v366
    %v369 = vmul.f32 %v357, %v367
    %v370 = vld [vmem:[%s1] sm:$0xff]
    %v371 = vld [vmem:[%s1 + $0x8] sm:$0xff]
    %v372 = vld [vmem:[%s1 + $0x10] sm:$0xff]
    %v373 = vld [vmem:[%s1 + $0x18] sm:$0xff]
    %v374 = vld [vmem:[%s1 + $0x20] sm:$0xff]
    %v375 = vld [vmem:[%s1 + $0x28] sm:$0xff]
    %v376 = vld [vmem:[%s1 + $0x30] sm:$0xff]
    %v377 = vld [vmem:[%s1 + $0x38] sm:$0xff]
    %vm378 = vcmask 130048
    %v380 = vsel %vm378, %v370, 0
    %v383 = vsel %vm378, %v371, 0
    %v386 = vsel %vm378, %v372, 0
    %v389 = vsel %vm378, %v373, 0
    %v392 = vsel %vm378, %v374, 0
    %v395 = vsel %vm378, %v375, 0
    %v398 = vsel %vm378, %v376, 0
    %v401 = vsel %vm378, %v377, 0
    %403 = vmatpush.msra.mxu0 0.0
    %404 = vmatpush.msra.mxu0 0.0
    %405 = vmatpush.msra.mxu0 0.0
    %406 = vmatpush.msra.mxu0 0.0
    %407 = vmatpush.msra.mxu0 0.0
    %408 = vmatpush.msra.mxu0 0.0
    %409 = vmatpush.msra.mxu0 0.0
    %410 = vmatpush.msra.mxu0 0.0
    %411 = vmatpush.msra.mxu0 0.0
    %412 = vmatpush.msra.mxu0 0.0
    %413 = vmatpush.msra.mxu0 0.0
    %414 = vmatpush.msra.mxu0 0.0
    %415 = vmatpush.msra.mxu0 0.0
    %416 = vmatpush.msra.mxu0 0.0
    %417 = vmatpush.msra.mxu0 %v369
    %418 = vmatpush.msra.mxu0 %v368
    %419 = vmatmul.f32.gmra.mxu0 %v380
    %v420 = vpop.f32.mrf.mxu0
    %v421 = vadd.f32 0.0, %v420
    %422 = vmatmul.f32.gmra.mxu0 %v383
    %v423 = vpop.f32.mrf.mxu0
    %v424 = vadd.f32 0.0, %v423
    %425 = vmatmul.f32.gmra.mxu0 %v386
    %v426 = vpop.f32.mrf.mxu0
    %v427 = vadd.f32 0.0, %v426
    %428 = vmatmul.f32.gmra.mxu0 %v389
    %v429 = vpop.f32.mrf.mxu0
    %v430 = vadd.f32 0.0, %v429
    %431 = vmatmul.f32.gmra.mxu0 %v392
    %v432 = vpop.f32.mrf.mxu0
    %v433 = vadd.f32 0.0, %v432
    %434 = vmatmul.f32.gmra.mxu0 %v395
    %v435 = vpop.f32.mrf.mxu0
    %v436 = vadd.f32 0.0, %v435
    %437 = vmatmul.f32.gmra.mxu0 %v398
    %v438 = vpop.f32.mrf.mxu0
    %v439 = vadd.f32 0.0, %v438
    %440 = vmatmul.f32.gmra.mxu0 %v401
    %v441 = vpop.f32.mrf.mxu0
    %v442 = vadd.f32 0.0, %v441
    %443 = vdwg.mxu0
    %v444 = vmul.f32 %v421, %v368
    %v445 = vmul.f32 %v424, %v369
    %v446 = vadd.f32 %v444, %v445
    %v447 = vrot.slane %v446, 4
    %v448 = vadd.f32 %v446, %v447
    %v449 = vrot.slane %v448, 2
    %v450 = vadd.f32 %v448, %v449
    %v451 = vrot.slane %v450, 1
    %v452 = vadd.f32 %v450, %v451
    %v453 = vmul.f32 %v427, %v368
    %v454 = vmul.f32 %v430, %v369
    %v455 = vadd.f32 %v453, %v454
    %v456 = vrot.slane %v455, 4
    %v457 = vadd.f32 %v455, %v456
    %v458 = vrot.slane %v457, 2
    %v459 = vadd.f32 %v457, %v458
    %v460 = vrot.slane %v459, 1
    %v461 = vadd.f32 %v459, %v460
    %v462 = vmul.f32 %v433, %v368
    %v463 = vmul.f32 %v436, %v369
    %v464 = vadd.f32 %v462, %v463
    %v465 = vrot.slane %v464, 4
    %v466 = vadd.f32 %v464, %v465
    %v467 = vrot.slane %v466, 2
    %v468 = vadd.f32 %v466, %v467
    %v469 = vrot.slane %v468, 1
    %v470 = vadd.f32 %v468, %v469
    %v471 = vmul.f32 %v439, %v368
    %v472 = vmul.f32 %v442, %v369
    %v473 = vadd.f32 %v471, %v472
    %v474 = vrot.slane %v473, 4
    %v475 = vadd.f32 %v473, %v474
    %v476 = vrot.slane %v475, 2
    %v477 = vadd.f32 %v475, %v476
    %v478 = vrot.slane %v477, 1
    %v479 = vadd.f32 %v477, %v478
    %vm480 = vcmask 1040384
    %v481 = vsel %vm480, %v452, %v461
    %vm482 = vcmask 1041408
    %v483 = vsel %vm482, %v481, %v470
    %vm484 = vcmask 1042432
    %v485 = vsel %vm484, %v483, %v479
    %486 = vst [vmem:[#allocation2] sm:$0xf] %v485
    // Predicated region
    $region10: #{tpu_custom_call.1} parent=1 // pred_check
      _
    $region11: #{tpu_custom_call.1} parent=1 // pred_check_branch
      %488 = sbr.rel (0) target = $region13
    $region12: #{tpu_custom_call.1} parent=1 // pred_region
      %490 = vsyncadd [#allocation3], 0
      %s492 = sshll.u32 [#allocation2], 4
      %s493 = int_to_ptr.vmem [resolvable:$true] %s492
      %s494 = sshll.u32 %s2, 4
      %s495 = int_to_ptr.hbm [resolvable:$true] %s494
      %497 = dma.vmem_to_hbm [thread:$0]  %s493, 64, %s495, [#allocation3]
    $region13: #{tpu_custom_call.1} parent=1 // pred_fallthru
      _
    // Predicated region
    $region14: #{tpu_custom_call.1} parent=1 // pred_check
      _
    $region15: #{tpu_custom_call.1} parent=1 // pred_check_branch
      %499 = sbr.rel (0) target = $region17
    $region16: #{tpu_custom_call.1} parent=1 // pred_region
      %501 = dma.done [#allocation3], 64
    $region17: #{tpu_custom_call.1} parent=1 // pred_fallthru
      _
    %502 = vsyncpa [#allocation3], 1

</llo_original>
